<compile_context>
chip_gen: v5e
topology: v5e:2x2
jax: 0.10.0
libtpu: 0.0.40
codegen_flags: <defaults>
</compile_context>

<pallas_src>
import jax
import jax.numpy as jnp
from jax.experimental import pallas as pl
from jax.experimental.pallas import tpu as pltpu

# ---- problem sizes (small, consistent with the module) ----------------------
B = 2            # batch
S = 16           # number of embeddings per batch element
C_IN = 64        # input_feat_size
C_OUT = 128      # output_feat_size (multiple of 128 -> lane-dense stores)
EPS = 1e-12      # nn.LayerNorm(eps=1e-12) in FeatureResizer


# -----------------------------------------------------------------------------
# Fused kernel: y = LayerNorm(x @ W + b) * gamma + beta   (dropout = identity)
#   x_ref : (B*S, C_IN)  bf16
#   w_ref : (C_IN, C_OUT) bf16
#   p_ref : (8, C_OUT)   f32   row 0 = bias, row 1 = gamma, row 2 = beta
#   o_ref : (B*S, C_OUT) f32
# -----------------------------------------------------------------------------
def feature_resizer_kernel(x_ref, w_ref, p_ref, o_ref):
    # MXU matmul, f32 accumulation; bias add in f32.
    y = jnp.dot(x_ref[...], w_ref[...],
                preferred_element_type=jnp.float32)          # (B*S, C_OUT) f32
    y = y + p_ref[0:1, :]                                    # + bias

    # One-pass LayerNorm statistics: two independent lane reductions.
    inv_c = 1.0 / C_OUT
    s = jnp.sum(y, axis=-1, keepdims=True)
    s2 = jnp.sum(y * y, axis=-1, keepdims=True)
    mu = s * inv_c
    var = jnp.maximum(s2 * inv_c - mu * mu, 0.0)             # clamp cancellation
    y = (y - mu) * jax.lax.rsqrt(var + EPS) * p_ref[1:2, :] + p_ref[2:3, :]

    # TODO(synk): nn.Dropout is identity in eval mode; training-mode stochastic
    # masking (pltpu.prng_seed / prng_random_bits) is not implemented here.
    o_ref[...] = y


def feature_resizer(encoder_features, params, do_ln=True):
    """encoder_features: (B, S, C_IN) float32 -> (B, S, C_OUT) float32."""
    assert do_ln, "kernel is specialized for do_ln=True (MDETR default)"
    Bx, Sx, Ci = encoder_features.shape
    R = Bx * Sx

    # Flatten leading dims -> lane/sublane-dense 2D slab; bf16 matmul inputs.
    x2d = encoder_features.reshape(R, Ci).astype(jnp.bfloat16)
    w_bf16 = params["w"].astype(jnp.bfloat16)

    # Pack bias / gamma / beta into one sublane-padded (8, C_OUT) f32 slab (1 DMA).
    packed = jnp.zeros((8, C_OUT), jnp.float32)
    packed = packed.at[0].set(params["b"].reshape(C_OUT))
    packed = packed.at[1].set(params["g"].reshape(C_OUT))
    packed = packed.at[2].set(params["beta"].reshape(C_OUT))

    bytes_accessed = (x2d.size * 2          # bf16 activations
                      + w_bf16.size * 2     # bf16 weights
                      + packed.size * 4     # f32 packed params
                      + R * C_OUT * 4)      # f32 output

    vmem = pltpu.MemorySpace.VMEM
    out2d = pl.pallas_call(
        feature_resizer_kernel,
        out_shape=jax.ShapeDtypeStruct((R, C_OUT), jnp.float32),
        in_specs=[pl.BlockSpec(memory_space=vmem)] * 3,   # whole arrays in VMEM
        out_specs=pl.BlockSpec(memory_space=vmem),
        cost_estimate=pl.CostEstimate(
            flops=2 * R * Ci * C_OUT,
            bytes_accessed=bytes_accessed,
            transcendentals=R),                           # one rsqrt per row
    )(x2d, w_bf16, packed)
    return out2d.reshape(Bx, Sx, C_OUT)


# -----------------------------------------------------------------------------
# Pure-JAX reference (same math, same bf16 matmul inputs) for verification
# -----------------------------------------------------------------------------
def reference_feature_resizer(encoder_features, params):
    Bx, Sx, Ci = encoder_features.shape
    x = encoder_features.reshape(Bx * Sx, Ci).astype(jnp.bfloat16)
    w = params["w"].astype(jnp.bfloat16)
    y = jnp.dot(x, w, preferred_element_type=jnp.float32) + params["b"].reshape(1, C_OUT)
    mu = jnp.mean(y, axis=-1, keepdims=True)
    var = jnp.mean((y - mu) ** 2, axis=-1, keepdims=True)
    y = ((y - mu) * jax.lax.rsqrt(var + EPS) * params["g"].reshape(1, C_OUT)
         + params["beta"].reshape(1, C_OUT))
    return y.reshape(Bx, Sx, C_OUT)  # dropout = identity in eval mode


if __name__ == "__main__":
    root = jax.random.PRNGKey(0)
    k_x, k_w, k_b = jax.random.split(root, 3)

    x = jax.random.normal(k_x, (B, S, C_IN), dtype=jnp.float32)
    params = {
        # fc weight stored as (in, out) so the kernel computes x @ W
        "w": (0.1 * jax.random.normal(k_w, (C_IN, C_OUT))).astype(jnp.float32),
        "b": (0.1 * jax.random.normal(k_b, (C_OUT,))).astype(jnp.float32),
        "g": jnp.ones((C_OUT,), jnp.float32),       # LayerNorm weight
        "beta": jnp.zeros((C_OUT,), jnp.float32),   # LayerNorm bias
    }

    out = feature_resizer(x, params)
    out = jax.block_until_ready(out)

    ref = reference_feature_resizer(x, params)
    assert out.shape == (B, S, C_OUT)
    # bf16 matmul inputs + one-pass variance -> tolerance relaxed vs f32 path
    err = float(jnp.max(jnp.abs(out - ref)))
    assert err < 1e-2, f"mismatch vs reference: {err}"
    print("KERNEL_OK")
</pallas_src>

<mosaic_0001>
module attributes {stable_mosaic.version = 11 : i64} {
  func.func @feature_resizer_kernel(%arg0: memref<32x64xbf16, #tpu.memory_space<vmem>>, %arg1: memref<64x128xbf16, #tpu.memory_space<vmem>>, %arg2: memref<8x128xf32, #tpu.memory_space<vmem>>, %arg3: memref<32x128xf32, #tpu.memory_space<vmem>>) attributes {dimension_semantics = [], scalar_prefetch = 0 : i64, scratch_operands = 0 : i64, tpu.core_type = #tpu.core_type<tc>} {
    %c0 = arith.constant 0 : index
    %c0_0 = arith.constant 0 : index
    %0 = vector.load %arg0[%c0, %c0_0] : memref<32x64xbf16, #tpu.memory_space<vmem>>, vector<32x64xbf16>
    %c0_1 = arith.constant 0 : index
    %c0_2 = arith.constant 0 : index
    %1 = vector.load %arg1[%c0_1, %c0_2] : memref<64x128xbf16, #tpu.memory_space<vmem>>, vector<64x128xbf16>
    %cst = arith.constant dense<0.000000e+00> : vector<32x128xf32>
    %2 = tpu.matmul %0, %1, %cst {dimension_numbers = #tpu.dot_dimension_numbers<[1], [0], [0], [1], [0, 0, 1, 1], [], []>} : vector<32x64xbf16>, vector<64x128xbf16>, vector<32x128xf32> -> vector<32x128xf32>
    %c0_3 = arith.constant 0 : index
    %c0_4 = arith.constant 0 : index
    %3 = vector.load %arg2[%c0_3, %c0_4] : memref<8x128xf32, #tpu.memory_space<vmem>>, vector<1x128xf32>
    %4 = vector.broadcast %3 : vector<1x128xf32> to vector<32x128xf32>
    %5 = arith.addf %2, %4 : vector<32x128xf32>
    %cst_5 = arith.constant dense<0.000000e+00> : vector<32xf32>
    %6 = vector.multi_reduction <add>, %5, %cst_5 [1] : vector<32x128xf32> to vector<32xf32>
    %7 = vector.shape_cast %6 : vector<32xf32> to vector<32x1xf32>
    %8 = arith.mulf %5, %5 : vector<32x128xf32>
    %cst_6 = arith.constant dense<0.000000e+00> : vector<32xf32>
    %9 = vector.multi_reduction <add>, %8, %cst_6 [1] : vector<32x128xf32> to vector<32xf32>
    %10 = vector.shape_cast %9 : vector<32xf32> to vector<32x1xf32>
    %cst_7 = arith.constant 7.812500e-03 : f32
    %11 = vector.broadcast %cst_7 : f32 to vector<32x1xf32>
    %12 = arith.mulf %7, %11 : vector<32x1xf32>
    %cst_8 = arith.constant 7.812500e-03 : f32
    %13 = vector.broadcast %cst_8 : f32 to vector<32x1xf32>
    %14 = arith.mulf %10, %13 : vector<32x1xf32>
    %15 = arith.mulf %12, %12 : vector<32x1xf32>
    %16 = arith.subf %14, %15 : vector<32x1xf32>
    %cst_9 = arith.constant 0.000000e+00 : f32
    %17 = vector.broadcast %cst_9 : f32 to vector<32x1xf32>
    %18 = arith.maximumf %16, %17 : vector<32x1xf32>
    %19 = vector.broadcast %12 : vector<32x1xf32> to vector<32x128xf32>
    %20 = arith.subf %5, %19 : vector<32x128xf32>
    %cst_10 = arith.constant 9.99999996E-13 : f32
    %21 = vector.broadcast %cst_10 : f32 to vector<32x1xf32>
    %22 = arith.addf %18, %21 : vector<32x1xf32>
    %23 = math.rsqrt %22 : vector<32x1xf32>
    %24 = vector.broadcast %23 : vector<32x1xf32> to vector<32x128xf32>
    %25 = arith.mulf %20, %24 : vector<32x128xf32>
    %c1 = arith.constant 1 : index
    %c0_11 = arith.constant 0 : index
    %26 = vector.load %arg2[%c1, %c0_11] : memref<8x128xf32, #tpu.memory_space<vmem>>, vector<1x128xf32>
    %27 = vector.broadcast %26 : vector<1x128xf32> to vector<32x128xf32>
    %28 = arith.mulf %25, %27 : vector<32x128xf32>
    %c2 = arith.constant 2 : index
    %c0_12 = arith.constant 0 : index
    %29 = vector.load %arg2[%c2, %c0_12] : memref<8x128xf32, #tpu.memory_space<vmem>>, vector<1x128xf32>
    %30 = vector.broadcast %29 : vector<1x128xf32> to vector<32x128xf32>
    %31 = arith.addf %28, %30 : vector<32x128xf32>
    %c0_13 = arith.constant 0 : index
    %c0_14 = arith.constant 0 : index
    %32 = vector.load %arg3[%c0_13, %c0_14] : memref<32x128xf32, #tpu.memory_space<vmem>>, vector<32x128xf32>
    tpu.vector_store %arg3[%c0_13, %c0_14], %31 {strides = array<i32>} : memref<32x128xf32, #tpu.memory_space<vmem>>, vector<32x128xf32>,
    return
  }
}

</mosaic_0001>

<llo_original>
// kernel: tpu_custom_call.1
$region0: #{tpu_custom_call.1}
  #allocation0 [shape = 'u32[]', space=smem, size = 0x4, offset = 0x4, fixed_abs, tag = 'smem constant byte address 0x4 - core index']
  #allocation1 [shape = 'u32[72,128]{1,0:T(1,128)}', space=vmem, size = 0x9000, scoped, tag = 'internal scratch']
  %s0 = inlined_call_operand.hbm [shape: bf16[32,64], index: 0, kind: input, shape index: {}]
  %s1 = inlined_call_operand.hbm [shape: bf16[64,128], index: 1, kind: input, shape index: {}]
  %s2 = inlined_call_operand.hbm [shape: f32[8,128], index: 2, kind: input, shape index: {}]
  %s3 = inlined_call_operand.hbm [shape: f32[32,128], index: 3, kind: output, shape index: {}]
  %s4 = sld [smem:[#allocation0]]
  $region34: #{tpu_custom_call.1} parent=0
    _
  %s6 = ssub.s32 1, %s4
  %s7 = scalar_select 0, %s6, %s4
  $region1: #{tpu_custom_call.1} parent=0
    #allocation2 [shape = 'u8[8192]{0}', space=vmem, size = 0x2000, scoped, tag = 'input window, operand 0, single buffered']
    #allocation3 [shape = 's32[1]{0}', space=sflag, size = 0x4, scoped, tag = 'scoped memory for tpu_custom_call.1']
    #allocation4 [shape = 's32[1]{0}', space=sflag, size = 0x4, scoped, tag = 'scoped memory for tpu_custom_call.1']
    #allocation5 [shape = 'u8[16384]{0}', space=vmem, size = 0x4000, scoped, tag = 'input window, operand 1, single buffered']
    #allocation6 [shape = 's32[1]{0}', space=sflag, size = 0x4, scoped, tag = 'scoped memory for tpu_custom_call.1']
    #allocation7 [shape = 'u8[4096]{0}', space=vmem, size = 0x1000, scoped, tag = 'input window, operand 2, single buffered']
    #allocation8 [shape = 'u8[16384]{0}', space=vmem, size = 0x4000, scoped, tag = 'output window, operand 0, single buffered']
    %8 = vsyncpa [#allocation3], 0
    %9 = vsyncpa [#allocation6], 0
    %10 = vsyncpa [#allocation4], 0
    // Predicated region
    $region2: #{tpu_custom_call.1} parent=1 // pred_check
      _
    $region3: #{tpu_custom_call.1} parent=1 // pred_check_branch
      %12 = sbr.rel (0) target = $region5
    $region4: #{tpu_custom_call.1} parent=1 // pred_region
      %14 = vsyncadd [#allocation3], 0
      %s15 = sshll.u32 %s0, 4
      %s16 = int_to_ptr.hbm [resolvable:$true] %s15
      %s17 = sshll.u32 [#allocation2], 4
      %s18 = int_to_ptr.vmem [resolvable:$true] %s17
      %23 = dma.hbm_to_vmem [thread:$0]  %s16, 256, %s18, [#allocation3], 64, 64, 4
    $region5: #{tpu_custom_call.1} parent=1 // pred_fallthru
      _
    // Predicated region
    $region6: #{tpu_custom_call.1} parent=1 // pred_check
      _
    $region7: #{tpu_custom_call.1} parent=1 // pred_check_branch
      %25 = sbr.rel (0) target = $region9
    $region8: #{tpu_custom_call.1} parent=1 // pred_region
      %27 = vsyncadd [#allocation6], 0
      %s28 = sshll.u32 %s1, 4
      %s29 = int_to_ptr.hbm [resolvable:$true] %s28
      %s30 = sshll.u32 [#allocation5], 4
      %s31 = int_to_ptr.vmem [resolvable:$true] %s30
      %36 = dma.hbm_to_vmem [thread:$0]  %s29, 512, %s31, [#allocation6], 64, 64, 4
    $region9: #{tpu_custom_call.1} parent=1 // pred_fallthru
      _
    // Predicated region
    $region10: #{tpu_custom_call.1} parent=1 // pred_check
      _
    $region11: #{tpu_custom_call.1} parent=1 // pred_check_branch
      %38 = sbr.rel (0) target = $region13
    $region12: #{tpu_custom_call.1} parent=1 // pred_region
      %40 = vsyncadd [#allocation6], 0
      %s42 = sshll.u32 %s2, 4
      %s43 = int_to_ptr.hbm [resolvable:$true] %s42
      %s44 = sshll.u32 [#allocation7], 4
      %s45 = int_to_ptr.vmem [resolvable:$true] %s44
      %47 = dma.hbm_to_vmem [thread:$0]  %s43, 128, %s45, [#allocation6]
    $region13: #{tpu_custom_call.1} parent=1 // pred_fallthru
      _
    // Predicated region
    $region14: #{tpu_custom_call.1} parent=1 // pred_check
      _
    $region15: #{tpu_custom_call.1} parent=1 // pred_check_branch
      %49 = sbr.rel (0) target = $region17
    $region16: #{tpu_custom_call.1} parent=1 // pred_region
      %51 = dma.done [#allocation3], 256
    $region17: #{tpu_custom_call.1} parent=1 // pred_fallthru
      _
    // Predicated region
    $region18: #{tpu_custom_call.1} parent=1 // pred_check
      _
    $region19: #{tpu_custom_call.1} parent=1 // pred_check_branch
      %53 = sbr.rel (0) target = $region21
    $region20: #{tpu_custom_call.1} parent=1 // pred_region
      %55 = dma.done [#allocation6], 512
    $region21: #{tpu_custom_call.1} parent=1 // pred_fallthru
      _
    // Predicated region
    $region22: #{tpu_custom_call.1} parent=1 // pred_check
      _
    $region23: #{tpu_custom_call.1} parent=1 // pred_check_branch
      %57 = sbr.rel (0) target = $region25
    $region24: #{tpu_custom_call.1} parent=1 // pred_region
      %59 = dma.done [#allocation6], 128
    $region25: #{tpu_custom_call.1} parent=1 // pred_fallthru
      _
    %v61 = vld [vmem:[#allocation2] sm:$0xf]
    %v62 = vld [vmem:[#allocation2 + $0x4] sm:$0xf]
    %v63 = vld [vmem:[#allocation2 + $0x8] sm:$0xf]
    %v64 = vld [vmem:[#allocation2 + $0xc] sm:$0xf]
    %v65 = vld [vmem:[#allocation5] sm:$0xf]
    %v66 = vld [vmem:[#allocation5 + $0x4] sm:$0xf]
    %v67 = vld [vmem:[#allocation5 + $0x8] sm:$0xf]
    %v68 = vld [vmem:[#allocation5 + $0xc] sm:$0xf]
    %v69 = vld [vmem:[#allocation5 + $0x10] sm:$0xf]
    %v70 = vld [vmem:[#allocation5 + $0x14] sm:$0xf]
    %v71 = vld [vmem:[#allocation5 + $0x18] sm:$0xf]
    %v72 = vld [vmem:[#allocation5 + $0x1c] sm:$0xf]
    %v73 = vld [vmem:[#allocation7] sm:$0x1]
    %v74 = vperm.slane %v73, 0
    %v79 = vunpack.c.l.b16 %v61
    %v80 = vunpack.c.l.b16 %v62
    %v81 = vunpack.c.l.b16 %v63
    %v82 = vunpack.c.l.b16 %v64
    %v83 = vpack.c.b16 %v80, %v79
    %v84 = vpack.c.b16 %v82, %v81
    %v93 = vunpack.c.l.b16 %v65
    %v94 = vunpack.c.l.b16 %v66
    %v95 = vunpack.c.l.b16 %v67
    %v96 = vunpack.c.l.b16 %v68
    %v97 = vunpack.c.l.b16 %v69
    %v98 = vunpack.c.l.b16 %v70
    %v99 = vunpack.c.l.b16 %v71
    %v100 = vunpack.c.l.b16 %v72
    %v101 = vpack.c.b16 %v94, %v93
    %v102 = vpack.c.b16 %v96, %v95
    %v103 = vpack.c.b16 %v98, %v97
    %v104 = vpack.c.b16 %v100, %v99
    %vm109 = vcmask 523264
    %v111 = vsel %vm109, %v83, 0
    %v114 = vsel %vm109, %v84, 0
    %116 = vmatpush.bf16.msra.mxu0 0
    %117 = vmatpush.bf16.msra.mxu0 0
    %118 = vmatpush.bf16.msra.mxu0 0
    %119 = vmatpush.bf16.msra.mxu0 0
    %120 = vmatpush.bf16.msra.mxu0 %v104
    %121 = vmatpush.bf16.msra.mxu0 %v103
    %122 = vmatpush.bf16.msra.mxu0 %v102
    %123 = vmatpush.bf16.msra.mxu0 %v101
    %124 = vmatmul.bf16.gmra.mxu0 %v111
    %v125 = vpop.f32.mrf.mxu0
    %v126 = vadd.f32 %v74, %v125
    %v127 = vpop.f32.mrf.mxu0
    %v128 = vadd.f32 %v74, %v127
    %129 = vmatmul.bf16.gmra.mxu0 %v114
    %v130 = vpop.f32.mrf.mxu0
    %v131 = vadd.f32 %v74, %v130
    %v132 = vpop.f32.mrf.mxu0
    %v133 = vadd.f32 %v74, %v132
    %134 = vdwg.mxu0
    %135 = vadd.xlane.f32.xlu0 %v126
    %v136 = vpop.xlane.xlu0 %135
    %137 = vadd.xlane.f32.xlu0 %v128
    %v138 = vpop.xlane.xlu0 %137
    %139 = vadd.xlane.f32.xlu0 %v131
    %v140 = vpop.xlane.xlu0 %139
    %141 = vadd.xlane.f32.xlu0 %v133
    %v142 = vpop.xlane.xlu0 %141
    %v143 = vmul.f32 %v126, %v126
    %v144 = vmul.f32 %v128, %v128
    %v145 = vmul.f32 %v131, %v131
    %v146 = vmul.f32 %v133, %v133
    %147 = vadd.xlane.f32.xlu0 %v143
    %v148 = vpop.xlane.xlu0 %147
    %149 = vadd.xlane.f32.xlu0 %v144
    %v150 = vpop.xlane.xlu0 %149
    %151 = vadd.xlane.f32.xlu0 %v145
    %v152 = vpop.xlane.xlu0 %151
    %153 = vadd.xlane.f32.xlu0 %v146
    %v154 = vpop.xlane.xlu0 %153
    %v155 = vmul.f32 %v136, 0.0078125
    %v156 = vmul.f32 %v138, 0.0078125
    %v157 = vmul.f32 %v140, 0.0078125
    %v158 = vmul.f32 %v142, 0.0078125
    %v159 = vmul.f32 %v148, 0.0078125
    %v160 = vmul.f32 %v150, 0.0078125
    %v161 = vmul.f32 %v152, 0.0078125
    %v162 = vmul.f32 %v154, 0.0078125
    %v163 = vmul.f32 %v155, %v155
    %v164 = vmul.f32 %v156, %v156
    %v165 = vmul.f32 %v157, %v157
    %v166 = vmul.f32 %v158, %v158
    %v167 = vsub.f32 %v159, %v163
    %v168 = vsub.f32 %v160, %v164
    %v169 = vsub.f32 %v161, %v165
    %v170 = vsub.f32 %v162, %v166
    %v171 = vmax.f32 %v167, 0.0
    %v172 = vmax.f32 %v168, 0.0
    %v173 = vmax.f32 %v169, 0.0
    %v174 = vmax.f32 %v170, 0.0
    %v175 = vsub.f32 %v126, %v155
    %v176 = vsub.f32 %v128, %v156
    %v177 = vsub.f32 %v131, %v157
    %v178 = vsub.f32 %v133, %v158
    %v179 = vadd.f32 %v171, 1e-12
    %v180 = vadd.f32 %v172, 1e-12
    %v181 = vadd.f32 %v173, 1e-12
    %v182 = vadd.f32 %v174, 1e-12
    %v183 = vrsqrt.pop %v179
    %v184 = vmul.f32 %v183, %v179
    %v185 = vmul.f32 %v184, %v183
    %v186 = vmul.f32 0.5, %v185
    %v187 = vsub.f32 1.5, %v186
    %v188 = vmul.f32 %v183, %v187
    %vm189 = vweird.f32 %v179
    %vm190 = vweird.f32 %v183
    %vm191 = vmor %vm189, %vm190
    %v192 = vsel %vm191, %v183, %v188
    %v193 = vrsqrt.pop %v180
    %v194 = vmul.f32 %v193, %v180
    %v195 = vmul.f32 %v194, %v193
    %v196 = vmul.f32 0.5, %v195
    %v197 = vsub.f32 1.5, %v196
    %v198 = vmul.f32 %v193, %v197
    %vm199 = vweird.f32 %v180
    %vm200 = vweird.f32 %v193
    %vm201 = vmor %vm199, %vm200
    %v202 = vsel %vm201, %v193, %v198
    %v203 = vrsqrt.pop %v181
    %v204 = vmul.f32 %v203, %v181
    %v205 = vmul.f32 %v204, %v203
    %v206 = vmul.f32 0.5, %v205
    %v207 = vsub.f32 1.5, %v206
    %v208 = vmul.f32 %v203, %v207
    %vm209 = vweird.f32 %v181
    %vm210 = vweird.f32 %v203
    %vm211 = vmor %vm209, %vm210
    %v212 = vsel %vm211, %v203, %v208
    %v213 = vrsqrt.pop %v182
    %v214 = vmul.f32 %v213, %v182
    %v215 = vmul.f32 %v214, %v213
    %v216 = vmul.f32 0.5, %v215
    %v217 = vsub.f32 1.5, %v216
    %v218 = vmul.f32 %v213, %v217
    %vm219 = vweird.f32 %v182
    %vm220 = vweird.f32 %v213
    %vm221 = vmor %vm219, %vm220
    %v222 = vsel %vm221, %v213, %v218
    %v223 = vmul.f32 %v175, %v192
    %v224 = vmul.f32 %v176, %v202
    %v225 = vmul.f32 %v177, %v212
    %v226 = vmul.f32 %v178, %v222
    %v227 = vld [vmem:[#allocation7 + $0x1] sm:$0x1]
    %v228 = vperm.slane %v227, 0
    %v229 = vmul.f32 %v223, %v228
    %v230 = vmul.f32 %v224, %v228
    %v231 = vmul.f32 %v225, %v228
    %v232 = vmul.f32 %v226, %v228
    %v233 = vld [vmem:[#allocation7 + $0x2] sm:$0x1]
    %v234 = vperm.slane %v233, 0
    %v235 = vadd.f32 %v229, %v234
    %v236 = vadd.f32 %v230, %v234
    %v237 = vadd.f32 %v231, %v234
    %v238 = vadd.f32 %v232, %v234
    %239 = vst [vmem:[#allocation8] sm:$0xff] %v235
    %240 = vst [vmem:[#allocation8 + $0x8] sm:$0xff] %v236
    %241 = vst [vmem:[#allocation8 + $0x10] sm:$0xff] %v237
    %242 = vst [vmem:[#allocation8 + $0x18] sm:$0xff] %v238
    // Predicated region
    $region26: #{tpu_custom_call.1} parent=1 // pred_check
      _
    $region27: #{tpu_custom_call.1} parent=1 // pred_check_branch
      %244 = sbr.rel (0) target = $region29
    $region28: #{tpu_custom_call.1} parent=1 // pred_region
      %246 = vsyncadd [#allocation4], 0
      %s247 = sshll.u32 [#allocation8], 4
      %s248 = int_to_ptr.vmem [resolvable:$true] %s247
      %s249 = sshll.u32 %s3, 4
      %s250 = int_to_ptr.hbm [resolvable:$true] %s249
      %255 = dma.vmem_to_hbm [thread:$0]  %s248, 512, %s250, [#allocation4], 128, 128, 8
    $region29: #{tpu_custom_call.1} parent=1 // pred_fallthru
      _
    // Predicated region
    $region30: #{tpu_custom_call.1} parent=1 // pred_check
      _
    $region31: #{tpu_custom_call.1} parent=1 // pred_check_branch
      %257 = sbr.rel (0) target = $region33
    $region32: #{tpu_custom_call.1} parent=1 // pred_region
      %259 = dma.done [#allocation4], 512
    $region33: #{tpu_custom_call.1} parent=1 // pred_fallthru
      _
    %260 = vsyncpa [#allocation3], 1
    %261 = vsyncpa [#allocation6], 1
    %262 = vsyncpa [#allocation4], 1

</llo_original>
